<compile_context>
chip_gen: v6e
topology: v6e:2x2x1
jax: 0.10.0
libtpu: 0.0.40
codegen_flags: <defaults>
</compile_context>

<pallas_src>
import functools

import jax
import jax.numpy as jnp
from jax.experimental import pallas as pl
from jax.experimental.pallas import tpu as pltpu

F_LANES = 128  # lane width everything is padded to


# --------------------------------------------------------------------------- #
# Kernel
# --------------------------------------------------------------------------- #
def subtask_kernel(xg_ref, w_ref, b_ref, out_ref, *, k_subtask, emb_dim):
    x = xg_ref[0]  # (T, 128) f32: obs features in lanes [0,H), zeros elsewhere
    g = xg_ref[1]  # (T, 128) f32: Gumbel(0,1) noise in lanes [0,K), zeros elsewhere

    # packed, zero-padded parameters (one weight-slab DMA + one bias-slab DMA)
    w1, w2, w3, w4 = w_ref[0], w_ref[1], w_ref[2], w_ref[3]  # (128,128), bf16 or f32
    b1, b2, b3, b4 = b_ref[0], b_ref[1], b_ref[2], b_ref[3]  # (1,128) f32
    wd = w1.dtype  # MXU operand dtype; accumulation stays f32 below

    # ---- encoder: Linear(H,H) -> ReLU -> Linear(H,K)  (padded lanes stay 0) ----
    h = jnp.maximum(
        jnp.dot(x.astype(wd), w1, preferred_element_type=jnp.float32) + b1, 0.0)
    logits = jnp.dot(h.astype(wd), w2, preferred_element_type=jnp.float32) + b2

    # ---- gumbel_softmax(hard=True, tau=1.0, dim=-1) ----
    # Forward value of torch's straight-through combination
    # (y_hard - sg(y_soft) + y_soft) is the hard one-hot, and
    # argmax(softmax(y)) == argmax(y), so no exp/divide is needed.
    col = jax.lax.broadcasted_iota(jnp.int32, logits.shape, dimension=1)
    valid = col < k_subtask
    y = jnp.where(valid, logits + g, jnp.float32(-1e30))
    y_max = jnp.max(y, axis=-1, keepdims=True)
    # first-index argmax (torch tie-break semantics)
    idx = jnp.min(jnp.where(y == y_max, col, logits.shape[-1]),
                  axis=-1, keepdims=True)
    onehot = (col == idx).astype(jnp.float32)  # exact {0,1}, lanes [0, K)
    # TODO(synk): straight-through gradients require a jax.custom_vjp wrapper
    # that re-materializes y_soft; this kernel is forward-only.

    # ---- decoder: Linear(K,H) -> ReLU -> Linear(H,E) ----
    d = jnp.maximum(
        jnp.dot(onehot.astype(wd), w3, preferred_element_type=jnp.float32) + b3, 0.0)
    emb = jnp.dot(d.astype(wd), w4, preferred_element_type=jnp.float32) + b4

    # single lane-dense store: emb in lanes [0,E); one-hot shifted on the XLU
    # into lanes [E, E+K).  Valid because w4/b4 zero-padding keeps emb exactly
    # 0 beyond lane E and pack_params asserts E + K <= 128.
    out_ref[...] = emb + pltpu.roll(onehot, shift=emb_dim, axis=1)


# --------------------------------------------------------------------------- #
# Parameter packing (do ONCE at init / param-update time, not per forward)
# --------------------------------------------------------------------------- #
def pack_params(params, dtype=jnp.bfloat16):
    """Pack the four Linear layers into zero-padded slabs for the kernel.

    Returns dict(W=(4,128,128) in `dtype`, b=(4,1,128) f32, plus dims).  Zero
    padding makes every padded-lane contribution exactly 0, so results match
    the unpadded math.  Keep the result around and reuse it every forward —
    rebuilding these slabs per call costs as much as the kernel itself.
    """
    H = params["w1"].shape[0]
    K = params["w2"].shape[1]
    E = params["w4"].shape[1]
    assert H <= F_LANES and K <= F_LANES and E + K <= F_LANES

    f32 = jnp.float32
    W = jnp.zeros((4, F_LANES, F_LANES), f32)
    W = W.at[0, :H, :H].set(params["w1"].astype(f32))
    W = W.at[1, :H, :K].set(params["w2"].astype(f32))
    W = W.at[2, :K, :H].set(params["w3"].astype(f32))
    W = W.at[3, :H, :E].set(params["w4"].astype(f32))

    b = jnp.zeros((4, 1, F_LANES), f32)
    b = b.at[0, 0, :H].set(params["b1"].reshape(-1).astype(f32))
    b = b.at[1, 0, :K].set(params["b2"].reshape(-1).astype(f32))
    b = b.at[2, 0, :H].set(params["b3"].reshape(-1).astype(f32))
    b = b.at[3, 0, :E].set(params["b4"].reshape(-1).astype(f32))

    return dict(W=W.astype(dtype), b=b, hidden_dim=H, k_subtask=K, emb_dim=E)


# --------------------------------------------------------------------------- #
# Forward wrapper
# --------------------------------------------------------------------------- #
def subtask_encoder_decoder(x, gumbel, packed, *, num_tiles=1, max_tile_b=8192):
    """Forward pass.  Returns (subtask_emb (B,E), subtask_onehot (B,K)).

    num_tiles: keep 1 on v5e/v6e (single TensorCore — extra grid steps are
      ~0.35 us of pure serial overhead each).  On v7x pass 2 only when B is
      large (>= a few thousand rows) so the megacore split pays for the
      duplicated weight-slab DMA.
    max_tile_b: rows per grid step.  Scaling B is done by growing tile_b
      toward the VMEM budget first (8192 rows ~= 25 MiB of double-buffered
      tiles) and only then adding grid steps.
    If this module is called many times per step (per agent / per env), batch
    the rows into ONE call instead of invoking the kernel repeatedly — each
    invocation costs a couple of us of launch/prologue overhead.
    """
    B, H = x.shape
    K, E = packed["k_subtask"], packed["emb_dim"]
    assert H == packed["hidden_dim"] and gumbel.shape == (B, K)

    tile_b = -(-B // num_tiles)
    tile_b = min(-(-tile_b // 8) * 8, max_tile_b)  # sublane-aligned, VMEM-capped
    grid_b = pl.cdiv(B, tile_b)
    Bp = grid_b * tile_b

    f32 = jnp.float32
    # x and gumbel share one zero-padded input slab -> a single DMA stream.
    xg = jnp.zeros((2, Bp, F_LANES), f32)
    xg = xg.at[0, :B, :H].set(x.astype(f32))
    xg = xg.at[1, :B, :K].set(gumbel.astype(f32))

    W, bias = packed["W"], packed["b"]

    # VMEM budget: xg + out tiles are double-buffered; the weight/bias slabs
    # have a constant index_map so they are fetched once (they could also be
    # single-buffered with pipeline_mode=pl.Buffered(1) once tile_b is pushed
    # to the VMEM ceiling).  Only raise the scoped limit when needed (v5e's
    # default is 16 MiB).
    est = (2 * 2 * tile_b * F_LANES * 4          # xg slab, double-buffered
           + 2 * tile_b * F_LANES * 4            # packed output, double-buffered
           + 2 * W.size * W.dtype.itemsize       # weight slab
           + 2 * bias.size * bias.dtype.itemsize # bias slab
           + (1 << 20))                          # compiler-internal headroom
    vmem_limit = None if est < (14 << 20) else int(min(2 * est, 100 << 20))

    kernel = functools.partial(subtask_kernel, k_subtask=K, emb_dim=E)

    out = pl.pallas_call(
        kernel,
        out_shape=jax.ShapeDtypeStruct((Bp, F_LANES), f32),
        grid_spec=pltpu.PrefetchScalarGridSpec(
            num_scalar_prefetch=0,
            grid=(grid_b,),
            in_specs=[
                pl.BlockSpec((2, tile_b, F_LANES), lambda i: (0, i, 0)),   # x+gumbel
                pl.BlockSpec((4, F_LANES, F_LANES), lambda i: (0, 0, 0)),  # weights
                pl.BlockSpec((4, 1, F_LANES), lambda i: (0, 0, 0)),        # biases
            ],
            out_specs=pl.BlockSpec((tile_b, F_LANES), lambda i: (i, 0)),   # packed out
        ),
        compiler_params=pltpu.CompilerParams(
            dimension_semantics=("parallel",),
            vmem_limit_bytes=vmem_limit),
    )(xg, W, bias)

    subtask_emb = out[:B, :E]
    subtask_onehot = out[:B, E:E + K]
    return subtask_emb, subtask_onehot


# --------------------------------------------------------------------------- #
# Reference & test harness
# --------------------------------------------------------------------------- #
def init_params(key, hidden_dim, k_subtask, emb_dim):
    """Deterministic Linear params: W (in, out), b (1, out)."""
    ks = jax.random.split(key, 8)

    def linear(kw, kb, fan_in, fan_out):
        bound = 1.0 / jnp.sqrt(fan_in)
        w = jax.random.uniform(kw, (fan_in, fan_out), jnp.float32, -bound, bound)
        b = jax.random.uniform(kb, (1, fan_out), jnp.float32, -bound, bound)
        return w, b

    w1, b1 = linear(ks[0], ks[1], hidden_dim, hidden_dim)
    w2, b2 = linear(ks[2], ks[3], hidden_dim, k_subtask)
    w3, b3 = linear(ks[4], ks[5], k_subtask, hidden_dim)
    w4, b4 = linear(ks[6], ks[7], hidden_dim, emb_dim)
    return dict(w1=w1, b1=b1, w2=w2, b2=b2, w3=w3, b3=b3, w4=w4, b4=b4)


def reference_forward(x, gumbel, params, compute_dtype=jnp.float32):
    """Pure-JAX mirror of the PyTorch forward (same gumbel noise).

    compute_dtype=f32 reproduces the torch f32 forward.  compute_dtype=bf16
    mirrors the kernel's bf16 MXU operands (round dot operands to bf16,
    accumulate in f32), i.e. what the default bf16-packed weight slab computes.
    """
    hi = jax.lax.Precision.HIGHEST
    q = lambda a: a.astype(compute_dtype).astype(jnp.float32)
    mm = lambda a, b: jnp.dot(q(a), q(b), precision=hi)

    h = jnp.maximum(mm(x, params["w1"]) + params["b1"], 0.0)
    logits = mm(h, params["w2"]) + params["b2"]
    y = logits + gumbel
    y_soft = jax.nn.softmax(y, axis=-1)
    idx = jnp.argmax(y, axis=-1)
    y_hard = jax.nn.one_hot(idx, logits.shape[-1], dtype=jnp.float32)
    onehot = (y_hard - jax.lax.stop_gradient(y_soft)) + y_soft
    d = jnp.maximum(mm(onehot, params["w3"]) + params["b3"], 0.0)
    emb = mm(d, params["w4"]) + params["b4"]
    return emb, onehot


if __name__ == "__main__":
    # args.hidden_dim=32, args.K_subtask=8, args.subtask_emb_dim=16, batch=16
    HIDDEN, K_SUBTASK, EMB_DIM, BATCH = 32, 8, 16, 16

    key = jax.random.PRNGKey(0)
    k_param, k_x, k_g = jax.random.split(key, 3)

    params = init_params(k_param, HIDDEN, K_SUBTASK, EMB_DIM)
    x = jax.random.normal(k_x, (BATCH, HIDDEN), jnp.float32)
    # standard Gumbel(0,1) noise, same distribution torch's gumbel_softmax samples
    gumbel = jax.random.gumbel(k_g, (BATCH, K_SUBTASK), jnp.float32)

    # ---- f32-packed path: faithful to the torch f32 forward ----
    packed_f32 = pack_params(params, dtype=jnp.float32)
    emb32, oh32 = subtask_encoder_decoder(x, gumbel, packed_f32)
    jax.block_until_ready((emb32, oh32))

    assert emb32.shape == (BATCH, EMB_DIM)
    assert oh32.shape == (BATCH, K_SUBTASK)
    # hard one-hot rows: exact {0,1}, sum to 1
    assert jnp.allclose(jnp.sum(oh32, axis=-1), 1.0, atol=1e-6)
    assert bool(jnp.all((oh32 == 0.0) | (oh32 == 1.0)))

    ref_emb, ref_oh = reference_forward(x, gumbel, params, jnp.float32)
    assert jnp.allclose(oh32, ref_oh, atol=1e-5)
    assert jnp.allclose(emb32, ref_emb, atol=1e-3, rtol=1e-3)

    # ---- bf16-packed path (default): half weight-slab DMA, bf16 MXU rate ----
    packed_bf16 = pack_params(params)  # dtype=jnp.bfloat16
    emb16, oh16 = subtask_encoder_decoder(x, gumbel, packed_bf16)
    jax.block_until_ready((emb16, oh16))

    assert bool(jnp.all((oh16 == 0.0) | (oh16 == 1.0)))
    ref_emb16, ref_oh16 = reference_forward(x, gumbel, params, jnp.bfloat16)
    assert jnp.allclose(oh16, ref_oh16, atol=1e-5)
    assert jnp.allclose(emb16, ref_emb16, atol=1e-3, rtol=1e-3)

    print("KERNEL_OK")
</pallas_src>

<mosaic_0001>
module attributes {stable_mosaic.version = 11 : i64} {
  func.func @subtask_kernel(%arg0: i32, %arg1: memref<2x16x128xf32, #tpu.memory_space<vmem>>, %arg2: memref<4x128x128xf32, #tpu.memory_space<vmem>>, %arg3: memref<4x1x128xf32, #tpu.memory_space<vmem>>, %arg4: memref<16x128xf32, #tpu.memory_space<vmem>>) attributes {dimension_semantics = [#tpu.dimension_semantics<parallel>], iteration_bounds = array<i64: 1>, scalar_prefetch = 0 : i64, scratch_operands = 0 : i64, tpu.core_type = #tpu.core_type<tc>, window_params = [{transform_indices = @transform_0, window_bounds = array<i64: 2, 16, 128>}, {pipeline_mode = #tpu.pipeline_mode<synchronous>, transform_indices = @transform_1, window_bounds = array<i64: 4, 128, 128>}, {pipeline_mode = #tpu.pipeline_mode<synchronous>, transform_indices = @transform_2, window_bounds = array<i64: 4, 1, 128>}, {transform_indices = @transform_3, window_bounds = array<i64: 16, 128>}]} {
    %c0 = arith.constant 0 : index
    %c0_0 = arith.constant 0 : index
    %c0_1 = arith.constant 0 : index
    %0 = vector.load %arg1[%c0, %c0_0, %c0_1] : memref<2x16x128xf32, #tpu.memory_space<vmem>>, vector<1x16x128xf32>
    %1 = vector.shape_cast %0 : vector<1x16x128xf32> to vector<16x128xf32>
    %c1 = arith.constant 1 : index
    %c0_2 = arith.constant 0 : index
    %c0_3 = arith.constant 0 : index
    %2 = vector.load %arg1[%c1, %c0_2, %c0_3] : memref<2x16x128xf32, #tpu.memory_space<vmem>>, vector<1x16x128xf32>
    %3 = vector.shape_cast %2 : vector<1x16x128xf32> to vector<16x128xf32>
    %c0_4 = arith.constant 0 : index
    %c0_5 = arith.constant 0 : index
    %c0_6 = arith.constant 0 : index
    %4 = vector.load %arg2[%c0_4, %c0_5, %c0_6] : memref<4x128x128xf32, #tpu.memory_space<vmem>>, vector<1x128x128xf32>
    %5 = vector.shape_cast %4 : vector<1x128x128xf32> to vector<128x128xf32>
    %c1_7 = arith.constant 1 : index
    %c0_8 = arith.constant 0 : index
    %c0_9 = arith.constant 0 : index
    %6 = vector.load %arg2[%c1_7, %c0_8, %c0_9] : memref<4x128x128xf32, #tpu.memory_space<vmem>>, vector<1x128x128xf32>
    %7 = vector.shape_cast %6 : vector<1x128x128xf32> to vector<128x128xf32>
    %c2 = arith.constant 2 : index
    %c0_10 = arith.constant 0 : index
    %c0_11 = arith.constant 0 : index
    %8 = vector.load %arg2[%c2, %c0_10, %c0_11] : memref<4x128x128xf32, #tpu.memory_space<vmem>>, vector<1x128x128xf32>
    %9 = vector.shape_cast %8 : vector<1x128x128xf32> to vector<128x128xf32>
    %c3 = arith.constant 3 : index
    %c0_12 = arith.constant 0 : index
    %c0_13 = arith.constant 0 : index
    %10 = vector.load %arg2[%c3, %c0_12, %c0_13] : memref<4x128x128xf32, #tpu.memory_space<vmem>>, vector<1x128x128xf32>
    %11 = vector.shape_cast %10 : vector<1x128x128xf32> to vector<128x128xf32>
    %c0_14 = arith.constant 0 : index
    %c0_15 = arith.constant 0 : index
    %c0_16 = arith.constant 0 : index
    %12 = vector.load %arg3[%c0_14, %c0_15, %c0_16] : memref<4x1x128xf32, #tpu.memory_space<vmem>>, vector<1x1x128xf32>
    %13 = vector.shape_cast %12 : vector<1x1x128xf32> to vector<1x128xf32>
    %c1_17 = arith.constant 1 : index
    %c0_18 = arith.constant 0 : index
    %c0_19 = arith.constant 0 : index
    %14 = vector.load %arg3[%c1_17, %c0_18, %c0_19] : memref<4x1x128xf32, #tpu.memory_space<vmem>>, vector<1x1x128xf32>
    %15 = vector.shape_cast %14 : vector<1x1x128xf32> to vector<1x128xf32>
    %c2_20 = arith.constant 2 : index
    %c0_21 = arith.constant 0 : index
    %c0_22 = arith.constant 0 : index
    %16 = vector.load %arg3[%c2_20, %c0_21, %c0_22] : memref<4x1x128xf32, #tpu.memory_space<vmem>>, vector<1x1x128xf32>
    %17 = vector.shape_cast %16 : vector<1x1x128xf32> to vector<1x128xf32>
    %c3_23 = arith.constant 3 : index
    %c0_24 = arith.constant 0 : index
    %c0_25 = arith.constant 0 : index
    %18 = vector.load %arg3[%c3_23, %c0_24, %c0_25] : memref<4x1x128xf32, #tpu.memory_space<vmem>>, vector<1x1x128xf32>
    %19 = vector.shape_cast %18 : vector<1x1x128xf32> to vector<1x128xf32>
    %cst = arith.constant dense<0.000000e+00> : vector<16x128xf32>
    %20 = tpu.matmul %1, %5, %cst {dimension_numbers = #tpu.dot_dimension_numbers<[1], [0], [0], [1], [0, 0, 1, 1], [], []>} : vector<16x128xf32>, vector<128x128xf32>, vector<16x128xf32> -> vector<16x128xf32>
    %21 = vector.broadcast %13 : vector<1x128xf32> to vector<16x128xf32>
    %22 = arith.addf %20, %21 : vector<16x128xf32>
    %cst_26 = arith.constant 0.000000e+00 : f32
    %23 = vector.broadcast %cst_26 : f32 to vector<16x128xf32>
    %24 = arith.maximumf %22, %23 : vector<16x128xf32>
    %cst_27 = arith.constant dense<0.000000e+00> : vector<16x128xf32>
    %25 = tpu.matmul %24, %7, %cst_27 {dimension_numbers = #tpu.dot_dimension_numbers<[1], [0], [0], [1], [0, 0, 1, 1], [], []>} : vector<16x128xf32>, vector<128x128xf32>, vector<16x128xf32> -> vector<16x128xf32>
    %26 = vector.broadcast %15 : vector<1x128xf32> to vector<16x128xf32>
    %27 = arith.addf %25, %26 : vector<16x128xf32>
    %28 = tpu.iota {dimensions = array<i32: 1>} : vector<16x128xi32>
    %c8_i32 = arith.constant 8 : i32
    %29 = vector.broadcast %c8_i32 : i32 to vector<16x128xi32>
    %30 = arith.cmpi slt, %28, %29 : vector<16x128xi32>
    %31 = arith.addf %27, %3 : vector<16x128xf32>
    %cst_28 = arith.constant -1.000000e+30 : f32
    %32 = vector.broadcast %cst_28 : f32 to vector<16x128xf32>
    %33 = arith.select %30, %31, %32 : vector<16x128xi1>, vector<16x128xf32>
    %cst_29 = arith.constant dense<0xFF800000> : vector<16xf32>
    %34 = vector.multi_reduction <maximumf>, %33, %cst_29 [1] : vector<16x128xf32> to vector<16xf32>
    %35 = vector.shape_cast %34 : vector<16xf32> to vector<16x1xf32>
    %36 = vector.broadcast %35 : vector<16x1xf32> to vector<16x128xf32>
    %37 = arith.cmpf oeq, %33, %36 : vector<16x128xf32>
    %c128_i32 = arith.constant 128 : i32
    %38 = vector.broadcast %c128_i32 : i32 to vector<16x128xi32>
    %39 = arith.select %37, %28, %38 : vector<16x128xi1>, vector<16x128xi32>
    %cst_30 = arith.constant dense<2147483647> : vector<16xi32>
    %40 = vector.multi_reduction <minsi>, %39, %cst_30 [1] : vector<16x128xi32> to vector<16xi32>
    %41 = vector.shape_cast %40 : vector<16xi32> to vector<16x1xi32>
    %42 = vector.broadcast %41 : vector<16x1xi32> to vector<16x128xi32>
    %43 = arith.cmpi eq, %28, %42 : vector<16x128xi32>
    %44 = arith.extui %43 : vector<16x128xi1> to vector<16x128xi32>
    %45 = arith.sitofp %44 : vector<16x128xi32> to vector<16x128xf32>
    %cst_31 = arith.constant dense<0.000000e+00> : vector<16x128xf32>
    %46 = tpu.matmul %45, %9, %cst_31 {dimension_numbers = #tpu.dot_dimension_numbers<[1], [0], [0], [1], [0, 0, 1, 1], [], []>} : vector<16x128xf32>, vector<128x128xf32>, vector<16x128xf32> -> vector<16x128xf32>
    %47 = vector.broadcast %17 : vector<1x128xf32> to vector<16x128xf32>
    %48 = arith.addf %46, %47 : vector<16x128xf32>
    %cst_32 = arith.constant 0.000000e+00 : f32
    %49 = vector.broadcast %cst_32 : f32 to vector<16x128xf32>
    %50 = arith.maximumf %48, %49 : vector<16x128xf32>
    %cst_33 = arith.constant dense<0.000000e+00> : vector<16x128xf32>
    %51 = tpu.matmul %50, %11, %cst_33 {dimension_numbers = #tpu.dot_dimension_numbers<[1], [0], [0], [1], [0, 0, 1, 1], [], []>} : vector<16x128xf32>, vector<128x128xf32>, vector<16x128xf32> -> vector<16x128xf32>
    %52 = vector.broadcast %19 : vector<1x128xf32> to vector<16x128xf32>
    %53 = arith.addf %51, %52 : vector<16x128xf32>
    %c16_i32 = arith.constant 16 : i32
    %54 = tpu.dynamic_rotate %45 by %c16_i32 dim 1 : vector<16x128xf32>, i32 -> vector<16x128xf32>
    %55 = arith.addf %53, %54 : vector<16x128xf32>
    %c0_34 = arith.constant 0 : index
    %c0_35 = arith.constant 0 : index
    %56 = vector.load %arg4[%c0_34, %c0_35] : memref<16x128xf32, #tpu.memory_space<vmem>>, vector<16x128xf32>
    tpu.vector_store %arg4[%c0_34, %c0_35], %55 {strides = array<i32>} : memref<16x128xf32, #tpu.memory_space<vmem>>, vector<16x128xf32>,
    return
  }
  func.func @transform_0(%arg0: i32) -> (i32, i32, i32) {
    %c0_i32 = arith.constant 0 : i32
    %c0_i32_0 = arith.constant 0 : i32
    %c0_i32_1 = arith.constant 0 : i32
    return %c0_i32, %arg0, %c0_i32_0 : i32, i32, i32
  }
  func.func @transform_1(%arg0: i32) -> (i32, i32, i32) {
    %c0_i32 = arith.constant 0 : i32
    %c0_i32_0 = arith.constant 0 : i32
    %c0_i32_1 = arith.constant 0 : i32
    %c0_i32_2 = arith.constant 0 : i32
    return %c0_i32, %c0_i32_0, %c0_i32_1 : i32, i32, i32
  }
  func.func @transform_2(%arg0: i32) -> (i32, i32, i32) {
    %c0_i32 = arith.constant 0 : i32
    %c0_i32_0 = arith.constant 0 : i32
    %c0_i32_1 = arith.constant 0 : i32
    %c0_i32_2 = arith.constant 0 : i32
    return %c0_i32, %c0_i32_0, %c0_i32_1 : i32, i32, i32
  }
  func.func @transform_3(%arg0: i32) -> (i32, i32) {
    %c0_i32 = arith.constant 0 : i32
    %c0_i32_0 = arith.constant 0 : i32
    return %arg0, %c0_i32 : i32, i32
  }
}

</mosaic_0001>

<llo_original>
// kernel: tpu_custom_call.1
$region0: #{tpu_custom_call.1}
  #allocation0 [shape = 'u32[]', space=smem, size = 0x4, offset = 0x4, fixed_abs, tag = 'smem constant byte address 0x4 - core index']
  #allocation1 [shape = 'u32[144,128]{1,0:T(1,128)}', space=vmem, size = 0x12000, scoped, tag = 'internal scratch']
  %s0 = inlined_call_operand.hbm [shape: f32[2,16,128], index: 0, kind: input, shape index: {}]
  %s1 = inlined_call_operand.hbm [shape: f32[4,128,128], index: 1, kind: input, shape index: {}]
  %s2 = inlined_call_operand.hbm [shape: f32[4,1,128], index: 2, kind: input, shape index: {}]
  %s3 = inlined_call_operand.hbm [shape: f32[16,128], index: 3, kind: output, shape index: {}]
  %s4 = sld [smem:[#allocation0]]
  $region34: #{tpu_custom_call.1} parent=0
    _
  %s6 = ssub.s32 1, %s4
  %s7 = scalar_select 0, %s6, %s4
  $region1: #{tpu_custom_call.1} parent=0
    #allocation2 [shape = 'u8[16384]{0}', space=vmem, size = 0x4000, scoped, tag = 'input window, operand 0, single buffered']
    #allocation3 [shape = 's32[1]{0}', space=sflag, size = 0x4, scoped, tag = 'scoped memory for tpu_custom_call.1']
    #allocation4 [shape = 's32[1]{0}', space=sflag, size = 0x4, scoped, tag = 'scoped memory for tpu_custom_call.1']
    #allocation5 [shape = 'u8[262144]{0}', space=vmem, size = 0x40000, scoped, tag = 'input window, operand 1, single buffered']
    #allocation6 [shape = 's32[1]{0}', space=sflag, size = 0x4, scoped, tag = 'scoped memory for tpu_custom_call.1']
    #allocation7 [shape = 'u8[2048]{0}', space=vmem, size = 0x800, scoped, tag = 'input window, operand 2, single buffered']
    #allocation8 [shape = 'u8[8192]{0}', space=vmem, size = 0x2000, scoped, tag = 'output window, operand 0, single buffered']
    %8 = vsyncpa [#allocation3], 0
    %9 = vsyncpa [#allocation6], 0
    %10 = vsyncpa [#allocation4], 0
    // Predicated region
    $region2: #{tpu_custom_call.1} parent=1 // pred_check
      _
    $region3: #{tpu_custom_call.1} parent=1 // pred_check_branch
      %12 = sbr.rel (0) target = $region5
    $region4: #{tpu_custom_call.1} parent=1 // pred_region
      %s14 = ssub.s32 512, 512
      %15 = vsyncadd [#allocation3], %s14
      %s16 = sshll.u32 [#allocation2], 4
      %s17 = int_to_ptr.vmem [resolvable:$true] %s16
      %22 = dma.hbm_to_vmem [thread:$0]  %s0, 512, %s17, [#allocation3], 128, 128, 8
    $region5: #{tpu_custom_call.1} parent=1 // pred_fallthru
      _
    // Predicated region
    $region6: #{tpu_custom_call.1} parent=1 // pred_check
      _
    $region7: #{tpu_custom_call.1} parent=1 // pred_check_branch
      %24 = sbr.rel (0) target = $region9
    $region8: #{tpu_custom_call.1} parent=1 // pred_region
      %s26 = ssub.s32 8192, 8192
      %27 = vsyncadd [#allocation6], %s26
      %s28 = sshll.u32 [#allocation5], 4
      %s29 = int_to_ptr.vmem [resolvable:$true] %s28
      %34 = dma.hbm_to_vmem [thread:$0]  %s1, 8192, %s29, [#allocation6], 128, 128, 8
    $region9: #{tpu_custom_call.1} parent=1 // pred_fallthru
      _
    // Predicated region
    $region10: #{tpu_custom_call.1} parent=1 // pred_check
      _
    $region11: #{tpu_custom_call.1} parent=1 // pred_check_branch
      %36 = sbr.rel (0) target = $region13
    $region12: #{tpu_custom_call.1} parent=1 // pred_region
      %s38 = ssub.s32 64, 64
      %39 = vsyncadd [#allocation6], %s38
      %s40 = sshll.u32 [#allocation7], 4
      %s41 = int_to_ptr.vmem [resolvable:$true] %s40
      %46 = dma.hbm_to_vmem [thread:$0]  %s2, 64, %s41, [#allocation6], 16, 16, 1
    $region13: #{tpu_custom_call.1} parent=1 // pred_fallthru
      _
    // Predicated region
    $region14: #{tpu_custom_call.1} parent=1 // pred_check
      _
    $region15: #{tpu_custom_call.1} parent=1 // pred_check_branch
      %48 = sbr.rel (0) target = $region17
    $region16: #{tpu_custom_call.1} parent=1 // pred_region
      %49 = dma.done [#allocation3], 512
    $region17: #{tpu_custom_call.1} parent=1 // pred_fallthru
      _
    // Predicated region
    $region18: #{tpu_custom_call.1} parent=1 // pred_check
      _
    $region19: #{tpu_custom_call.1} parent=1 // pred_check_branch
      %51 = sbr.rel (0) target = $region21
    $region20: #{tpu_custom_call.1} parent=1 // pred_region
      %52 = dma.done [#allocation6], 8192
    $region21: #{tpu_custom_call.1} parent=1 // pred_fallthru
      _
    // Predicated region
    $region22: #{tpu_custom_call.1} parent=1 // pred_check
      _
    $region23: #{tpu_custom_call.1} parent=1 // pred_check_branch
      %54 = sbr.rel (0) target = $region25
    $region24: #{tpu_custom_call.1} parent=1 // pred_region
      %55 = dma.done [#allocation6], 64
    $region25: #{tpu_custom_call.1} parent=1 // pred_fallthru
      _
    %v56 = vld [vmem:[#allocation2] sm:$0xff]
    %v57 = vld [vmem:[#allocation2 + $0x8] sm:$0xff]
    %s58 = scalar_lea.vmem [#allocation2], 16
    %v59 = vld [vmem:[%s58] sm:$0xff]
    %v60 = vld [vmem:[%s58 + $0x8] sm:$0xff]
    %v61 = vld [vmem:[#allocation5] sm:$0xff]
    %v62 = vld [vmem:[#allocation5 + $0x8] sm:$0xff]
    %v63 = vld [vmem:[#allocation5 + $0x10] sm:$0xff]
    %v64 = vld [vmem:[#allocation5 + $0x18] sm:$0xff]
    %v65 = vld [vmem:[#allocation5 + $0x20] sm:$0xff]
    %v66 = vld [vmem:[#allocation5 + $0x28] sm:$0xff]
    %v67 = vld [vmem:[#allocation5 + $0x30] sm:$0xff]
    %v68 = vld [vmem:[#allocation5 + $0x38] sm:$0xff]
    %v69 = vld [vmem:[#allocation5 + $0x40] sm:$0xff]
    %v70 = vld [vmem:[#allocation5 + $0x48] sm:$0xff]
    %v71 = vld [vmem:[#allocation5 + $0x50] sm:$0xff]
    %v72 = vld [vmem:[#allocation5 + $0x58] sm:$0xff]
    %v73 = vld [vmem:[#allocation5 + $0x60] sm:$0xff]
    %v74 = vld [vmem:[#allocation5 + $0x68] sm:$0xff]
    %v75 = vld [vmem:[#allocation5 + $0x70] sm:$0xff]
    %v76 = vld [vmem:[#allocation5 + $0x78] sm:$0xff]
    %s77 = scalar_lea.vmem [#allocation5], 128
    %v78 = vld [vmem:[%s77] sm:$0xff]
    %v79 = vld [vmem:[%s77 + $0x8] sm:$0xff]
    %v80 = vld [vmem:[%s77 + $0x10] sm:$0xff]
    %v81 = vld [vmem:[%s77 + $0x18] sm:$0xff]
    %v82 = vld [vmem:[%s77 + $0x20] sm:$0xff]
    %v83 = vld [vmem:[%s77 + $0x28] sm:$0xff]
    %v84 = vld [vmem:[%s77 + $0x30] sm:$0xff]
    %v85 = vld [vmem:[%s77 + $0x38] sm:$0xff]
    %v86 = vld [vmem:[%s77 + $0x40] sm:$0xff]
    %v87 = vld [vmem:[%s77 + $0x48] sm:$0xff]
    %v88 = vld [vmem:[%s77 + $0x50] sm:$0xff]
    %v89 = vld [vmem:[%s77 + $0x58] sm:$0xff]
    %v90 = vld [vmem:[%s77 + $0x60] sm:$0xff]
    %v91 = vld [vmem:[%s77 + $0x68] sm:$0xff]
    %v92 = vld [vmem:[%s77 + $0x70] sm:$0xff]
    %v93 = vld [vmem:[%s77 + $0x78] sm:$0xff]
    %s94 = scalar_lea.vmem [#allocation5], 256
    %v95 = vld [vmem:[%s94] sm:$0xff]
    %v96 = vld [vmem:[%s94 + $0x8] sm:$0xff]
    %v97 = vld [vmem:[%s94 + $0x10] sm:$0xff]
    %v98 = vld [vmem:[%s94 + $0x18] sm:$0xff]
    %v99 = vld [vmem:[%s94 + $0x20] sm:$0xff]
    %v100 = vld [vmem:[%s94 + $0x28] sm:$0xff]
    %v101 = vld [vmem:[%s94 + $0x30] sm:$0xff]
    %v102 = vld [vmem:[%s94 + $0x38] sm:$0xff]
    %v103 = vld [vmem:[%s94 + $0x40] sm:$0xff]
    %v104 = vld [vmem:[%s94 + $0x48] sm:$0xff]
    %v105 = vld [vmem:[%s94 + $0x50] sm:$0xff]
    %v106 = vld [vmem:[%s94 + $0x58] sm:$0xff]
    %v107 = vld [vmem:[%s94 + $0x60] sm:$0xff]
    %v108 = vld [vmem:[%s94 + $0x68] sm:$0xff]
    %v109 = vld [vmem:[%s94 + $0x70] sm:$0xff]
    %v110 = vld [vmem:[%s94 + $0x78] sm:$0xff]
    %s111 = scalar_lea.vmem [#allocation5], 384
    %v112 = vld [vmem:[%s111] sm:$0xff]
    %v113 = vld [vmem:[%s111 + $0x8] sm:$0xff]
    %v114 = vld [vmem:[%s111 + $0x10] sm:$0xff]
    %v115 = vld [vmem:[%s111 + $0x18] sm:$0xff]
    %v116 = vld [vmem:[%s111 + $0x20] sm:$0xff]
    %v117 = vld [vmem:[%s111 + $0x28] sm:$0xff]
    %v118 = vld [vmem:[%s111 + $0x30] sm:$0xff]
    %v119 = vld [vmem:[%s111 + $0x38] sm:$0xff]
    %v120 = vld [vmem:[%s111 + $0x40] sm:$0xff]
    %v121 = vld [vmem:[%s111 + $0x48] sm:$0xff]
    %v122 = vld [vmem:[%s111 + $0x50] sm:$0xff]
    %v123 = vld [vmem:[%s111 + $0x58] sm:$0xff]
    %v124 = vld [vmem:[%s111 + $0x60] sm:$0xff]
    %v125 = vld [vmem:[%s111 + $0x68] sm:$0xff]
    %v126 = vld [vmem:[%s111 + $0x70] sm:$0xff]
    %v127 = vld [vmem:[%s111 + $0x78] sm:$0xff]
    %v128 = vld [vmem:[#allocation7] sm:$0x1]
    %s129 = scalar_lea.vmem [#allocation7], 1
    %v130 = vld [vmem:[%s129] sm:$0x1]
    %s131 = scalar_lea.vmem [#allocation7], 2
    %v132 = vld [vmem:[%s131] sm:$0x1]
    %s133 = scalar_lea.vmem [#allocation7], 3
    %v134 = vld [vmem:[%s133] sm:$0x1]
    %v136 = vlaneseq
    %v137 = vshrl.u32 %v136, 7
    %v138 = vsub.s32 0, %v137
    %v139 = vrot.slane %v128, %v138
    %141 = vmatprep.subr.mxu0 0.0
    %142 = vmatpush1.msra.mxu0 %v76
    %143 = vmatprep.subr.mxu0 0.0
    %144 = vmatpush1.msra.mxu0 %v75
    %145 = vmatprep.subr.mxu0 0.0
    %146 = vmatpush1.msra.mxu0 %v74
    %147 = vmatprep.subr.mxu0 0.0
    %148 = vmatpush1.msra.mxu0 %v73
    %149 = vmatprep.subr.mxu0 0.0
    %150 = vmatpush1.msra.mxu0 %v72
    %151 = vmatprep.subr.mxu0 0.0
    %152 = vmatpush1.msra.mxu0 %v71
    %153 = vmatprep.subr.mxu0 0.0
    %154 = vmatpush1.msra.mxu0 %v70
    %155 = vmatprep.subr.mxu0 0.0
    %156 = vmatpush1.msra.mxu0 %v69
    %157 = vmatprep.subr.mxu0 0.0
    %158 = vmatpush1.msra.mxu0 %v68
    %159 = vmatprep.subr.mxu0 0.0
    %160 = vmatpush1.msra.mxu0 %v67
    %161 = vmatprep.subr.mxu0 0.0
    %162 = vmatpush1.msra.mxu0 %v66
    %163 = vmatprep.subr.mxu0 0.0
    %164 = vmatpush1.msra.mxu0 %v65
    %165 = vmatprep.subr.mxu0 0.0
    %166 = vmatpush1.msra.mxu0 %v64
    %167 = vmatprep.subr.mxu0 0.0
    %168 = vmatpush1.msra.mxu0 %v63
    %169 = vmatprep.subr.mxu0 0.0
    %170 = vmatpush1.msra.mxu0 %v62
    %171 = vmatprep.subr.mxu0 0.0
    %172 = vmatpush1.msra.mxu0 %v61
    %173 = vmatprep.subr.mxu0 0.0
    %174 = vmatpush2.msra.mxu0 0.0
    %175 = vmatprep.subr.mxu0 0.0
    %176 = vmatpush2.msra.mxu0 0.0
    %177 = vmatprep.subr.mxu0 0.0
    %178 = vmatpush2.msra.mxu0 0.0
    %179 = vmatprep.subr.mxu0 0.0
    %180 = vmatpush2.msra.mxu0 0.0
    %181 = vmatprep.subr.mxu0 0.0
    %182 = vmatpush2.msra.mxu0 0.0
    %183 = vmatprep.subr.mxu0 0.0
    %184 = vmatpush2.msra.mxu0 0.0
    %185 = vmatprep.subr.mxu0 0.0
    %186 = vmatpush2.msra.mxu0 0.0
    %187 = vmatprep.subr.mxu0 0.0
    %188 = vmatpush2.msra.mxu0 0.0
    %189 = vmatprep.subr.mxu0 0.0
    %190 = vmatpush2.msra.mxu0 0.0
    %191 = vmatprep.subr.mxu0 0.0
    %192 = vmatpush2.msra.mxu0 0.0
    %193 = vmatprep.subr.mxu0 0.0
    %194 = vmatpush2.msra.mxu0 0.0
    %195 = vmatprep.subr.mxu0 0.0
    %196 = vmatpush2.msra.mxu0 0.0
    %197 = vmatprep.subr.mxu0 0.0
    %198 = vmatpush2.msra.mxu0 0.0
    %199 = vmatprep.subr.mxu0 0.0
    %200 = vmatpush2.msra.mxu0 0.0
    %201 = vmatprep.subr.mxu0 0.0
    %202 = vmatpush2.msra.mxu0 0.0
    %203 = vmatprep.subr.mxu0 0.0
    %204 = vmatpush2.msra.mxu0 0.0
    %205 = vmatprep.mubr.f32.mxu0 0.0
    %206 = vmatmul.mubr.f32.gmra.mxu0 %v56
    %v207 = vpop.f32.mrf.mxu0
    %v208 = vadd.f32 %v139, %v207
    %v209 = vpop.f32.mrf.mxu0
    %210 = vmatprep.mubr.f32.mxu0 0.0
    %211 = vmatmul.mubr.f32.gmra.mxu0 %v57
    %v212 = vpop.f32.mrf.mxu0
    %v213 = vadd.f32 %v139, %v212
    %v214 = vpop.f32.mrf.mxu0
    %215 = vdwg.mxu0
    %v216 = vmax.f32 %v208, 0.0
    %v217 = vmax.f32 %v213, 0.0
    %v219 = vlaneseq
    %v220 = vshrl.u32 %v219, 7
    %v221 = vsub.s32 0, %v220
    %v222 = vrot.slane %v130, %v221
    %224 = vmatprep.subr.mxu0 0.0
    %225 = vmatpush1.msra.mxu0 %v93
    %226 = vmatprep.subr.mxu0 0.0
    %227 = vmatpush1.msra.mxu0 %v92
    %228 = vmatprep.subr.mxu0 0.0
    %229 = vmatpush1.msra.mxu0 %v91
    %230 = vmatprep.subr.mxu0 0.0
    %231 = vmatpush1.msra.mxu0 %v90
    %232 = vmatprep.subr.mxu0 0.0
    %233 = vmatpush1.msra.mxu0 %v89
    %234 = vmatprep.subr.mxu0 0.0
    %235 = vmatpush1.msra.mxu0 %v88
    %236 = vmatprep.subr.mxu0 0.0
    %237 = vmatpush1.msra.mxu0 %v87
    %238 = vmatprep.subr.mxu0 0.0
    %239 = vmatpush1.msra.mxu0 %v86
    %240 = vmatprep.subr.mxu0 0.0
    %241 = vmatpush1.msra.mxu0 %v85
    %242 = vmatprep.subr.mxu0 0.0
    %243 = vmatpush1.msra.mxu0 %v84
    %244 = vmatprep.subr.mxu0 0.0
    %245 = vmatpush1.msra.mxu0 %v83
    %246 = vmatprep.subr.mxu0 0.0
    %247 = vmatpush1.msra.mxu0 %v82
    %248 = vmatprep.subr.mxu0 0.0
    %249 = vmatpush1.msra.mxu0 %v81
    %250 = vmatprep.subr.mxu0 0.0
    %251 = vmatpush1.msra.mxu0 %v80
    %252 = vmatprep.subr.mxu0 0.0
    %253 = vmatpush1.msra.mxu0 %v79
    %254 = vmatprep.subr.mxu0 0.0
    %255 = vmatpush1.msra.mxu0 %v78
    %256 = vmatprep.subr.mxu0 0.0
    %257 = vmatpush2.msra.mxu0 0.0
    %258 = vmatprep.subr.mxu0 0.0
    %259 = vmatpush2.msra.mxu0 0.0
    %260 = vmatprep.subr.mxu0 0.0
    %261 = vmatpush2.msra.mxu0 0.0
    %262 = vmatprep.subr.mxu0 0.0
    %263 = vmatpush2.msra.mxu0 0.0
    %264 = vmatprep.subr.mxu0 0.0
    %265 = vmatpush2.msra.mxu0 0.0
    %266 = vmatprep.subr.mxu0 0.0
    %267 = vmatpush2.msra.mxu0 0.0
    %268 = vmatprep.subr.mxu0 0.0
    %269 = vmatpush2.msra.mxu0 0.0
    %270 = vmatprep.subr.mxu0 0.0
    %271 = vmatpush2.msra.mxu0 0.0
    %272 = vmatprep.subr.mxu0 0.0
    %273 = vmatpush2.msra.mxu0 0.0
    %274 = vmatprep.subr.mxu0 0.0
    %275 = vmatpush2.msra.mxu0 0.0
    %276 = vmatprep.subr.mxu0 0.0
    %277 = vmatpush2.msra.mxu0 0.0
    %278 = vmatprep.subr.mxu0 0.0
    %279 = vmatpush2.msra.mxu0 0.0
    %280 = vmatprep.subr.mxu0 0.0
    %281 = vmatpush2.msra.mxu0 0.0
    %282 = vmatprep.subr.mxu0 0.0
    %283 = vmatpush2.msra.mxu0 0.0
    %284 = vmatprep.subr.mxu0 0.0
    %285 = vmatpush2.msra.mxu0 0.0
    %286 = vmatprep.subr.mxu0 0.0
    %287 = vmatpush2.msra.mxu0 0.0
    %288 = vmatprep.mubr.f32.mxu0 0.0
    %289 = vmatmul.mubr.f32.gmra.mxu0 %v216
    %v290 = vpop.f32.mrf.mxu0
    %v291 = vadd.f32 %v222, %v290
    %v292 = vpop.f32.mrf.mxu0
    %293 = vmatprep.mubr.f32.mxu0 0.0
    %294 = vmatmul.mubr.f32.gmra.mxu0 %v217
    %v295 = vpop.f32.mrf.mxu0
    %v296 = vadd.f32 %v222, %v295
    %v297 = vpop.f32.mrf.mxu0
    %298 = vdwg.mxu0
    %v299 = vlaneseq
    %v300 = vand.u32 %v299, 127
    %vm301 = vcmp.lt.s32.totalorder %v300, 8
    %v302 = vadd.f32 %v291, %v59
    %v303 = vadd.f32 %v296, %v60
    %v304 = vsel %vm301, %v302, -1e+30
    %v305 = vsel %vm301, %v303, -1e+30
    %306 = vmax.xlane.f32.xlu0 %v304
    %v307 = vpop.xlane.xlu0 %306
    %308 = vmax.xlane.f32.xlu0 %v305
    %v309 = vpop.xlane.xlu0 %308
    %vm310 = vcmp.eq.f32.partialorder %v304, %v307
    %vm311 = vcmp.eq.f32.partialorder %v305, %v309
    %v312 = vsel %vm310, %v300, 128
    %v313 = vsel %vm311, %v300, 128
    %v314 = vand.u32 %v312, 65535
    %v315 = vshra.s32 %v312, 16
    %v316 = vcvt.s32.f32 %v314
    %v317 = vcvt.s32.f32 %v315
    %318 = vmin.xlane.f32.xlu0 %v317
    %v319 = vpop.xlane.xlu0 %318
    %vm320 = vcmp.eq.f32.partialorder %v317, %v319
    %v321 = vsel %vm320, %v316, inf
    %322 = vmin.xlane.f32.xlu0 %v321
    %v323 = vpop.xlane.xlu0 %322
    %v324 = vcvt.f32.s32 %v323
    %v325 = vcvt.f32.s32 %v319
    %v326 = vshll.u32 %v325, 16
    %v327 = vadd.s32 %v326, %v324
    %v328 = vand.u32 %v313, 65535
    %v329 = vshra.s32 %v313, 16
    %v330 = vcvt.s32.f32 %v328
    %v331 = vcvt.s32.f32 %v329
    %332 = vmin.xlane.f32.xlu0 %v331
    %v333 = vpop.xlane.xlu0 %332
    %vm334 = vcmp.eq.f32.partialorder %v331, %v333
    %v335 = vsel %vm334, %v330, inf
    %336 = vmin.xlane.f32.xlu0 %v335
    %v337 = vpop.xlane.xlu0 %336
    %v338 = vcvt.f32.s32 %v337
    %v339 = vcvt.f32.s32 %v333
    %v340 = vshll.u32 %v339, 16
    %v341 = vadd.s32 %v340, %v338
    %vm342 = vcmp.eq.s32.totalorder %v300, %v327
    %vm343 = vcmp.eq.s32.totalorder %v300, %v341
    %v344 = vsel %vm342, 1, 0
    %v345 = vsel %vm343, 1, 0
    %v346 = vcvt.s32.f32 %v344
    %v347 = vcvt.s32.f32 %v345
    %v349 = vlaneseq
    %v350 = vshrl.u32 %v349, 7
    %v351 = vsub.s32 0, %v350
    %v352 = vrot.slane %v132, %v351
    %354 = vmatprep.subr.mxu0 0.0
    %355 = vmatpush1.msra.mxu0 %v110
    %356 = vmatprep.subr.mxu0 0.0
    %357 = vmatpush1.msra.mxu0 %v109
    %358 = vmatprep.subr.mxu0 0.0
    %359 = vmatpush1.msra.mxu0 %v108
    %360 = vmatprep.subr.mxu0 0.0
    %361 = vmatpush1.msra.mxu0 %v107
    %362 = vmatprep.subr.mxu0 0.0
    %363 = vmatpush1.msra.mxu0 %v106
    %364 = vmatprep.subr.mxu0 0.0
    %365 = vmatpush1.msra.mxu0 %v105
    %366 = vmatprep.subr.mxu0 0.0
    %367 = vmatpush1.msra.mxu0 %v104
    %368 = vmatprep.subr.mxu0 0.0
    %369 = vmatpush1.msra.mxu0 %v103
    %370 = vmatprep.subr.mxu0 0.0
    %371 = vmatpush1.msra.mxu0 %v102
    %372 = vmatprep.subr.mxu0 0.0
    %373 = vmatpush1.msra.mxu0 %v101
    %374 = vmatprep.subr.mxu0 0.0
    %375 = vmatpush1.msra.mxu0 %v100
    %376 = vmatprep.subr.mxu0 0.0
    %377 = vmatpush1.msra.mxu0 %v99
    %378 = vmatprep.subr.mxu0 0.0
    %379 = vmatpush1.msra.mxu0 %v98
    %380 = vmatprep.subr.mxu0 0.0
    %381 = vmatpush1.msra.mxu0 %v97
    %382 = vmatprep.subr.mxu0 0.0
    %383 = vmatpush1.msra.mxu0 %v96
    %384 = vmatprep.subr.mxu0 0.0
    %385 = vmatpush1.msra.mxu0 %v95
    %386 = vmatprep.subr.mxu0 0.0
    %387 = vmatpush2.msra.mxu0 0.0
    %388 = vmatprep.subr.mxu0 0.0
    %389 = vmatpush2.msra.mxu0 0.0
    %390 = vmatprep.subr.mxu0 0.0
    %391 = vmatpush2.msra.mxu0 0.0
    %392 = vmatprep.subr.mxu0 0.0
    %393 = vmatpush2.msra.mxu0 0.0
    %394 = vmatprep.subr.mxu0 0.0
    %395 = vmatpush2.msra.mxu0 0.0
    %396 = vmatprep.subr.mxu0 0.0
    %397 = vmatpush2.msra.mxu0 0.0
    %398 = vmatprep.subr.mxu0 0.0
    %399 = vmatpush2.msra.mxu0 0.0
    %400 = vmatprep.subr.mxu0 0.0
    %401 = vmatpush2.msra.mxu0 0.0
    %402 = vmatprep.subr.mxu0 0.0
    %403 = vmatpush2.msra.mxu0 0.0
    %404 = vmatprep.subr.mxu0 0.0
    %405 = vmatpush2.msra.mxu0 0.0
    %406 = vmatprep.subr.mxu0 0.0
    %407 = vmatpush2.msra.mxu0 0.0
    %408 = vmatprep.subr.mxu0 0.0
    %409 = vmatpush2.msra.mxu0 0.0
    %410 = vmatprep.subr.mxu0 0.0
    %411 = vmatpush2.msra.mxu0 0.0
    %412 = vmatprep.subr.mxu0 0.0
    %413 = vmatpush2.msra.mxu0 0.0
    %414 = vmatprep.subr.mxu0 0.0
    %415 = vmatpush2.msra.mxu0 0.0
    %416 = vmatprep.subr.mxu0 0.0
    %417 = vmatpush2.msra.mxu0 0.0
    %418 = vmatprep.mubr.f32.mxu0 0.0
    %419 = vmatmul.mubr.f32.gmra.mxu0 %v346
    %v420 = vpop.f32.mrf.mxu0
    %v421 = vadd.f32 %v352, %v420
    %v422 = vpop.f32.mrf.mxu0
    %423 = vmatprep.mubr.f32.mxu0 0.0
    %424 = vmatmul.mubr.f32.gmra.mxu0 %v347
    %v425 = vpop.f32.mrf.mxu0
    %v426 = vadd.f32 %v352, %v425
    %v427 = vpop.f32.mrf.mxu0
    %428 = vdwg.mxu0
    %v429 = vmax.f32 %v421, 0.0
    %v430 = vmax.f32 %v426, 0.0
    %v432 = vlaneseq
    %v433 = vshrl.u32 %v432, 7
    %v434 = vsub.s32 0, %v433
    %v435 = vrot.slane %v134, %v434
    %437 = vmatprep.subr.mxu0 0.0
    %438 = vmatpush1.msra.mxu0 %v127
    %439 = vmatprep.subr.mxu0 0.0
    %440 = vmatpush1.msra.mxu0 %v126
    %441 = vmatprep.subr.mxu0 0.0
    %442 = vmatpush1.msra.mxu0 %v125
    %443 = vmatprep.subr.mxu0 0.0
    %444 = vmatpush1.msra.mxu0 %v124
    %445 = vmatprep.subr.mxu0 0.0
    %446 = vmatpush1.msra.mxu0 %v123
    %447 = vmatprep.subr.mxu0 0.0
    %448 = vmatpush1.msra.mxu0 %v122
    %449 = vmatprep.subr.mxu0 0.0
    %450 = vmatpush1.msra.mxu0 %v121
    %451 = vmatprep.subr.mxu0 0.0
    %452 = vmatpush1.msra.mxu0 %v120
    %453 = vmatprep.subr.mxu0 0.0
    %454 = vmatpush1.msra.mxu0 %v119
    %455 = vmatprep.subr.mxu0 0.0
    %456 = vmatpush1.msra.mxu0 %v118
    %457 = vmatprep.subr.mxu0 0.0
    %458 = vmatpush1.msra.mxu0 %v117
    %459 = vmatprep.subr.mxu0 0.0
    %460 = vmatpush1.msra.mxu0 %v116
    %461 = vmatprep.subr.mxu0 0.0
    %462 = vmatpush1.msra.mxu0 %v115
    %463 = vmatprep.subr.mxu0 0.0
    %464 = vmatpush1.msra.mxu0 %v114
    %465 = vmatprep.subr.mxu0 0.0
    %466 = vmatpush1.msra.mxu0 %v113
    %467 = vmatprep.subr.mxu0 0.0
    %468 = vmatpush1.msra.mxu0 %v112
    %469 = vmatprep.subr.mxu0 0.0
    %470 = vmatpush2.msra.mxu0 0.0
    %471 = vmatprep.subr.mxu0 0.0
    %472 = vmatpush2.msra.mxu0 0.0
    %473 = vmatprep.subr.mxu0 0.0
    %474 = vmatpush2.msra.mxu0 0.0
    %475 = vmatprep.subr.mxu0 0.0
    %476 = vmatpush2.msra.mxu0 0.0
    %477 = vmatprep.subr.mxu0 0.0
    %478 = vmatpush2.msra.mxu0 0.0
    %479 = vmatprep.subr.mxu0 0.0
    %480 = vmatpush2.msra.mxu0 0.0
    %481 = vmatprep.subr.mxu0 0.0
    %482 = vmatpush2.msra.mxu0 0.0
    %483 = vmatprep.subr.mxu0 0.0
    %484 = vmatpush2.msra.mxu0 0.0
    %485 = vmatprep.subr.mxu0 0.0
    %486 = vmatpush2.msra.mxu0 0.0
    %487 = vmatprep.subr.mxu0 0.0
    %488 = vmatpush2.msra.mxu0 0.0
    %489 = vmatprep.subr.mxu0 0.0
    %490 = vmatpush2.msra.mxu0 0.0
    %491 = vmatprep.subr.mxu0 0.0
    %492 = vmatpush2.msra.mxu0 0.0
    %493 = vmatprep.subr.mxu0 0.0
    %494 = vmatpush2.msra.mxu0 0.0
    %495 = vmatprep.subr.mxu0 0.0
    %496 = vmatpush2.msra.mxu0 0.0
    %497 = vmatprep.subr.mxu0 0.0
    %498 = vmatpush2.msra.mxu0 0.0
    %499 = vmatprep.subr.mxu0 0.0
    %500 = vmatpush2.msra.mxu0 0.0
    %501 = vmatprep.mubr.f32.mxu0 0.0
    %502 = vmatmul.mubr.f32.gmra.mxu0 %v429
    %v503 = vpop.f32.mrf.mxu0
    %v504 = vadd.f32 %v435, %v503
    %v505 = vpop.f32.mrf.mxu0
    %506 = vmatprep.mubr.f32.mxu0 0.0
    %507 = vmatmul.mubr.f32.gmra.mxu0 %v430
    %v508 = vpop.f32.mrf.mxu0
    %v509 = vadd.f32 %v435, %v508
    %v510 = vpop.f32.mrf.mxu0
    %511 = vdwg.mxu0
    %512 = vrot.lane.b32.xlu0 %v346, 16
    %v513 = vpop.permute.xlu0 %512
    %514 = vrot.lane.b32.xlu0 %v347, 16
    %v515 = vpop.permute.xlu0 %514
    %v516 = vadd.f32 %v504, %v513
    %v517 = vadd.f32 %v509, %v515
    %518 = vst [vmem:[#allocation8] sm:$0xff] %v516
    %519 = vst [vmem:[#allocation8 + $0x8] sm:$0xff] %v517
    // Predicated region
    $region26: #{tpu_custom_call.1} parent=1 // pred_check
      _
    $region27: #{tpu_custom_call.1} parent=1 // pred_check_branch
      %521 = sbr.rel (0) target = $region29
    $region28: #{tpu_custom_call.1} parent=1 // pred_region
      %s523 = ssub.s32 256, 256
      %524 = vsyncadd [#allocation4], %s523
      %s525 = sshll.u32 [#allocation8], 4
      %s526 = int_to_ptr.vmem [resolvable:$true] %s525
      %531 = dma.vmem_to_hbm [thread:$0]  %s526, 256, %s3, [#allocation4], 128, 128, 8
    $region29: #{tpu_custom_call.1} parent=1 // pred_fallthru
      _
    // Predicated region
    $region30: #{tpu_custom_call.1} parent=1 // pred_check
      _
    $region31: #{tpu_custom_call.1} parent=1 // pred_check_branch
      %533 = sbr.rel (0) target = $region33
    $region32: #{tpu_custom_call.1} parent=1 // pred_region
      %534 = dma.done [#allocation4], 256
    $region33: #{tpu_custom_call.1} parent=1 // pred_fallthru
      _
    %535 = vsyncpa [#allocation3], 1
    %536 = vsyncpa [#allocation6], 1
    %537 = vsyncpa [#allocation4], 1

</llo_original>
